<compile_context>
chip_gen: v7x
topology: tpu7x:2x2x1
jax: 0.10.0
libtpu: 0.0.40
codegen_flags: <defaults>
</compile_context>

<pallas_src>
import functools

import jax
import jax.numpy as jnp
from jax.experimental import pallas as pl
from jax.experimental.pallas import tpu as pltpu

EPS = 1e-5
LANE = 128


def _round_up(n, m):
    return ((n + m - 1) // m) * m


def _chip_vmem_bytes():
    """Physical VMEM per TensorCore; conservative fallback if the query is unavailable."""
    try:
        info = pltpu.get_tpu_info()
        cap = getattr(info, "vmem_capacity_bytes", None)
        if cap:
            return int(cap)
    except Exception:
        pass
    return 64 * 1024 * 1024  # v7x per-TC size (most restrictive generation)


def _alphazero_kernel(x_ref, w_in_ref, b_in_ref,
                      w_res_ref, b_res_ref, gamma_ref, beta_ref,
                      w_head_ref, b_head_ref,
                      out_ref, *, d_out, approx_recip):
    compute_dtype = w_in_ref.dtype          # bf16 by default (MXU operands); f32 if caller opted
    inv_b = 1.0 / x_ref.shape[0]            # static batch size

    # ---- input layer + ReLU (x already cast to MXU dtype wrapper-side) ------
    h = jnp.dot(x_ref[...], w_in_ref[...], preferred_element_type=jnp.float32)
    h = jnp.maximum(h + b_in_ref[...], 0.0)

    # ---- 3 residual blocks: Linear + residual, BatchNorm1d (train), ReLU ----
    for i in range(3):
        lin = jnp.dot(h.astype(compute_dtype), w_res_ref[i],
                      preferred_element_type=jnp.float32) + b_res_ref[i]
        h = lin + h
        # fused single-pass stats: mean and E[x^2] together (biased variance, train mode)
        mean = jnp.sum(h, axis=0, keepdims=True) * inv_b
        meansq = jnp.sum(h * h, axis=0, keepdims=True) * inv_b
        var = jnp.maximum(meansq - mean * mean, 0.0)
        # BN affine folded into the normalization: 2 full (B,H) passes instead of 4
        scale = gamma_ref[i] * jax.lax.rsqrt(var + EPS)
        shift = beta_ref[i] - mean * scale
        h = jnp.maximum(h * scale + shift, 0.0)

    # ---- fused policy+value head: one matmul, lane-dense (B, P) output ------
    head = jnp.dot(h.astype(compute_dtype), w_head_ref[...],
                   preferred_element_type=jnp.float32) + b_head_ref[...]

    lane = jax.lax.broadcasted_iota(jnp.int32, head.shape, 1)
    is_pol = lane < d_out          # policy lanes
    is_val = lane == d_out         # single value lane

    # masked softmax over the policy lanes only
    m = jnp.max(jnp.where(is_pol, head, -jnp.inf), axis=-1, keepdims=True)
    safe_head = jnp.where(is_pol, head, m)                 # avoid exp overflow on pad lanes
    e = jnp.where(is_pol, jnp.exp(safe_head - m), 0.0)
    denom = jnp.sum(e, axis=-1, keepdims=True)
    p = e * pl.reciprocal(denom, approx=approx_recip)      # approx -> EUP slot (default)

    # tanh only on the value column (B,1), not the whole (B,P) slab
    v_col = jnp.sum(jnp.where(is_val, head, 0.0), axis=-1, keepdims=True)
    v = jnp.tanh(v_col)

    # value lane gets tanh; padding lanes stay 0 (e == 0 there)
    out_ref[...] = jnp.where(is_val, v, p)                 # single unmasked lane-dense store


def pack_params(params, *, matmul_dtype=jnp.bfloat16):
    """One-time parameter prep (call once, reuse across forward calls).

    * Fuses the policy + value heads into a single matmul, zero-padded to a multiple of
      128 output lanes.
    * Pads the hidden dimension to a multiple of 128 lanes (zero weights, zero beta on the
      pad lanes -> padded activations are exactly 0 everywhere, results unchanged).
    * Casts MXU operands to `matmul_dtype` (bf16 recommended on all generations); biases and
      BN affine parameters stay f32 since they feed f32 VPU math.
    """
    d_in, H = params["w_in"].shape
    d_out = params["w_pol"].shape[1]
    Hp = _round_up(H, LANE)
    P = _round_up(d_out + 1, LANE)
    ph = Hp - H
    pp = P - (d_out + 1)

    w_in = jnp.pad(params["w_in"], ((0, 0), (0, ph))).astype(matmul_dtype)
    b_in = jnp.pad(params["b_in"], ((0, 0), (0, ph)))
    w_res = jnp.pad(params["w_res"], ((0, 0), (0, ph), (0, ph))).astype(matmul_dtype)
    b_res = jnp.pad(params["b_res"], ((0, 0), (0, 0), (0, ph)))
    gamma = jnp.pad(params["gamma"], ((0, 0), (0, 0), (0, ph)), constant_values=1.0)
    beta = jnp.pad(params["beta"], ((0, 0), (0, 0), (0, ph)))           # pad beta must be 0

    w_head = jnp.concatenate([params["w_pol"], params["w_val"]], axis=1)
    w_head = jnp.pad(w_head, ((0, ph), (0, pp))).astype(matmul_dtype)
    b_head = jnp.concatenate([params["b_pol"], params["b_val"]], axis=1)
    b_head = jnp.pad(b_head, ((0, 0), (0, pp)))

    return {
        "w_in": w_in, "b_in": b_in, "w_res": w_res, "b_res": b_res,
        "gamma": gamma, "beta": beta, "w_head": w_head, "b_head": b_head,
        "d_in": d_in, "d_out": d_out, "Hp": Hp, "P": P,
        "matmul_dtype": matmul_dtype,
    }


def alphazero_forward(x, packed, *, approx_recip=True):
    """x: (B, d_in) or (d_in,). Returns (B, d_out + 1) = [softmax(policy) | tanh(value)].

    `packed` comes from pack_params() (done once, outside the hot loop).  The whole batch is
    processed by one program so BatchNorm sees full-batch statistics; everything is VMEM
    resident, so keep weights + ~4*B*max(H,128)*4 bytes under ~56 MiB (v7x) / ~100 MiB (v5e/v6e).
    """
    if x.ndim == 1:
        x = x[None, :]
    x = x.astype(packed["matmul_dtype"])     # cast wrapper-side: halves the x DMA in bf16 mode
    B = x.shape[0]
    d_out = packed["d_out"]
    Hp, P = packed["Hp"], packed["P"]

    inputs = (x, packed["w_in"], packed["b_in"], packed["w_res"], packed["b_res"],
              packed["gamma"], packed["beta"], packed["w_head"], packed["b_head"])

    # --- honest VMEM budget, clamped to the chip's physical VMEM -------------
    io_bytes = sum(int(a.size) * a.dtype.itemsize for a in inputs) + B * P * 4
    work_bytes = 4 * B * max(Hp, P) * 4      # live f32 activation slabs (h, lin, h*h, head)
    vmem_limit = io_bytes + work_bytes + (2 << 20)
    cap = _chip_vmem_bytes()
    vmem_limit = int(max(16 << 20, min(vmem_limit, cap - (8 << 20))))

    cost = pl.CostEstimate(
        flops=int(2 * B * (packed["d_in"] * Hp + 3 * Hp * Hp + Hp * P)),
        transcendentals=int(B * (d_out + 2) + 3 * Hp),
        bytes_accessed=int(io_bytes),
    )

    vmem = pltpu.MemorySpace.VMEM
    out_padded = pl.pallas_call(
        functools.partial(_alphazero_kernel, d_out=d_out, approx_recip=approx_recip),
        out_shape=jax.ShapeDtypeStruct((B, P), jnp.float32),
        in_specs=[pl.BlockSpec(memory_space=vmem)] * len(inputs),
        out_specs=pl.BlockSpec(memory_space=vmem),
        compiler_params=pltpu.CompilerParams(vmem_limit_bytes=vmem_limit),
        cost_estimate=cost,
    )(*inputs)

    return out_padded[:, :d_out + 1]


def init_params(key, d_in, d_hidden, d_out):
    ks = jax.random.split(key, 8)
    s_in = 1.0 / jnp.sqrt(d_in)
    s_h = 1.0 / jnp.sqrt(d_hidden)
    return {
        "w_in": jax.random.uniform(ks[0], (d_in, d_hidden), jnp.float32, -s_in, s_in),
        "b_in": jax.random.uniform(ks[1], (1, d_hidden), jnp.float32, -s_in, s_in),
        "w_res": jax.random.uniform(ks[2], (3, d_hidden, d_hidden), jnp.float32, -s_h, s_h),
        "b_res": jax.random.uniform(ks[3], (3, 1, d_hidden), jnp.float32, -s_h, s_h),
        "gamma": jnp.ones((3, 1, d_hidden), jnp.float32),
        "beta": jnp.zeros((3, 1, d_hidden), jnp.float32),
        "w_pol": jax.random.uniform(ks[4], (d_hidden, d_out), jnp.float32, -s_h, s_h),
        "b_pol": jax.random.uniform(ks[5], (1, d_out), jnp.float32, -s_h, s_h),
        "w_val": jax.random.uniform(ks[6], (d_hidden, 1), jnp.float32, -s_h, s_h),
        "b_val": jax.random.uniform(ks[7], (1, 1), jnp.float32, -s_h, s_h),
    }


def reference_forward(x, p):
    """Pure-JAX reference mirroring the PyTorch forward (training-mode BatchNorm)."""
    if x.ndim == 1:
        x = x[None, :]
    h = jax.nn.relu(x @ p["w_in"] + p["b_in"])
    for i in range(3):
        h = (h @ p["w_res"][i] + p["b_res"][i]) + h
        mean = h.mean(0, keepdims=True)
        var = ((h - mean) ** 2).mean(0, keepdims=True)
        h = (h - mean) / jnp.sqrt(var + EPS) * p["gamma"][i] + p["beta"][i]
        h = jax.nn.relu(h)
    pol = jax.nn.softmax(h @ p["w_pol"] + p["b_pol"], axis=-1)
    val = jnp.tanh(h @ p["w_val"] + p["b_val"])
    return jnp.concatenate([pol, val], axis=1)


if __name__ == "__main__":
    D_IN, D_HIDDEN, D_OUT = 16, 32, 8
    B = 2

    key = jax.random.PRNGKey(0)
    k_x, k_p = jax.random.split(key)
    x = jax.random.normal(k_x, (B, D_IN), jnp.float32)
    params = init_params(k_p, D_IN, D_HIDDEN, D_OUT)

    ref = jax.block_until_ready(reference_forward(x, params))

    # --- exact-math path (f32 MXU operands, exact reciprocal): tight parity check ---
    packed_f32 = pack_params(params, matmul_dtype=jnp.float32)
    out_f32 = jax.block_until_ready(alphazero_forward(x, packed_f32, approx_recip=False))
    assert out_f32.shape == (B, D_OUT + 1), out_f32.shape
    assert jnp.allclose(out_f32, ref, atol=1e-4, rtol=1e-4), (out_f32, ref)

    # --- production-default path (bf16 MXU operands, approx EUP reciprocal): loose check ---
    packed = pack_params(params)
    out_bf16 = jax.block_until_ready(alphazero_forward(x, packed))
    assert out_bf16.shape == (B, D_OUT + 1), out_bf16.shape
    assert jnp.allclose(out_bf16, ref, atol=5e-2, rtol=5e-2), (out_bf16, ref)

    print("KERNEL_OK")
</pallas_src>

<mosaic_0001>
module attributes {stable_mosaic.version = 11 : i64} {
  func.func @_alphazero_kernel(%arg0: memref<2x16xf32, #tpu.memory_space<vmem>>, %arg1: memref<16x128xf32, #tpu.memory_space<vmem>>, %arg2: memref<1x128xf32, #tpu.memory_space<vmem>>, %arg3: memref<3x128x128xf32, #tpu.memory_space<vmem>>, %arg4: memref<3x1x128xf32, #tpu.memory_space<vmem>>, %arg5: memref<3x1x128xf32, #tpu.memory_space<vmem>>, %arg6: memref<3x1x128xf32, #tpu.memory_space<vmem>>, %arg7: memref<128x128xf32, #tpu.memory_space<vmem>>, %arg8: memref<1x128xf32, #tpu.memory_space<vmem>>, %arg9: memref<2x128xf32, #tpu.memory_space<vmem>>) attributes {dimension_semantics = [], scalar_prefetch = 0 : i64, scratch_operands = 0 : i64, tpu.core_type = #tpu.core_type<tc>} {
    %c0 = arith.constant 0 : index
    %c0_0 = arith.constant 0 : index
    %0 = vector.load %arg0[%c0, %c0_0] : memref<2x16xf32, #tpu.memory_space<vmem>>, vector<2x16xf32>
    %c0_1 = arith.constant 0 : index
    %c0_2 = arith.constant 0 : index
    %1 = vector.load %arg1[%c0_1, %c0_2] : memref<16x128xf32, #tpu.memory_space<vmem>>, vector<16x128xf32>
    %cst = arith.constant dense<0.000000e+00> : vector<2x128xf32>
    %2 = tpu.matmul %0, %1, %cst {dimension_numbers = #tpu.dot_dimension_numbers<[1], [0], [0], [1], [0, 0, 1, 1], [], []>} : vector<2x16xf32>, vector<16x128xf32>, vector<2x128xf32> -> vector<2x128xf32>
    %c0_3 = arith.constant 0 : index
    %c0_4 = arith.constant 0 : index
    %3 = vector.load %arg2[%c0_3, %c0_4] : memref<1x128xf32, #tpu.memory_space<vmem>>, vector<1x128xf32>
    %4 = vector.broadcast %3 : vector<1x128xf32> to vector<2x128xf32>
    %5 = arith.addf %2, %4 : vector<2x128xf32>
    %cst_5 = arith.constant 0.000000e+00 : f32
    %6 = vector.broadcast %cst_5 : f32 to vector<2x128xf32>
    %7 = arith.maximumf %5, %6 : vector<2x128xf32>
    %c0_6 = arith.constant 0 : index
    %c0_7 = arith.constant 0 : index
    %c0_8 = arith.constant 0 : index
    %8 = vector.load %arg3[%c0_6, %c0_7, %c0_8] : memref<3x128x128xf32, #tpu.memory_space<vmem>>, vector<1x128x128xf32>
    %9 = vector.shape_cast %8 : vector<1x128x128xf32> to vector<128x128xf32>
    %cst_9 = arith.constant dense<0.000000e+00> : vector<2x128xf32>
    %10 = tpu.matmul %7, %9, %cst_9 {dimension_numbers = #tpu.dot_dimension_numbers<[1], [0], [0], [1], [0, 0, 1, 1], [], []>} : vector<2x128xf32>, vector<128x128xf32>, vector<2x128xf32> -> vector<2x128xf32>
    %c0_10 = arith.constant 0 : index
    %c0_11 = arith.constant 0 : index
    %c0_12 = arith.constant 0 : index
    %11 = vector.load %arg4[%c0_10, %c0_11, %c0_12] : memref<3x1x128xf32, #tpu.memory_space<vmem>>, vector<1x1x128xf32>
    %12 = vector.shape_cast %11 : vector<1x1x128xf32> to vector<1x128xf32>
    %13 = vector.broadcast %12 : vector<1x128xf32> to vector<2x128xf32>
    %14 = arith.addf %10, %13 : vector<2x128xf32>
    %15 = arith.addf %14, %7 : vector<2x128xf32>
    %cst_13 = arith.constant dense<0.000000e+00> : vector<128xf32>
    %16 = vector.multi_reduction <add>, %15, %cst_13 [0] : vector<2x128xf32> to vector<128xf32>
    %17 = vector.shape_cast %16 : vector<128xf32> to vector<1x128xf32>
    %cst_14 = arith.constant 5.000000e-01 : f32
    %18 = vector.broadcast %cst_14 : f32 to vector<1x128xf32>
    %19 = arith.mulf %17, %18 : vector<1x128xf32>
    %20 = arith.mulf %15, %15 : vector<2x128xf32>
    %cst_15 = arith.constant dense<0.000000e+00> : vector<128xf32>
    %21 = vector.multi_reduction <add>, %20, %cst_15 [0] : vector<2x128xf32> to vector<128xf32>
    %22 = vector.shape_cast %21 : vector<128xf32> to vector<1x128xf32>
    %cst_16 = arith.constant 5.000000e-01 : f32
    %23 = vector.broadcast %cst_16 : f32 to vector<1x128xf32>
    %24 = arith.mulf %22, %23 : vector<1x128xf32>
    %25 = arith.mulf %19, %19 : vector<1x128xf32>
    %26 = arith.subf %24, %25 : vector<1x128xf32>
    %cst_17 = arith.constant 0.000000e+00 : f32
    %27 = vector.broadcast %cst_17 : f32 to vector<1x128xf32>
    %28 = arith.maximumf %26, %27 : vector<1x128xf32>
    %c0_18 = arith.constant 0 : index
    %c0_19 = arith.constant 0 : index
    %c0_20 = arith.constant 0 : index
    %29 = vector.load %arg5[%c0_18, %c0_19, %c0_20] : memref<3x1x128xf32, #tpu.memory_space<vmem>>, vector<1x1x128xf32>
    %30 = vector.shape_cast %29 : vector<1x1x128xf32> to vector<1x128xf32>
    %cst_21 = arith.constant 9.99999974E-6 : f32
    %31 = vector.broadcast %cst_21 : f32 to vector<1x128xf32>
    %32 = arith.addf %28, %31 : vector<1x128xf32>
    %33 = math.rsqrt %32 : vector<1x128xf32>
    %34 = arith.mulf %30, %33 : vector<1x128xf32>
    %c0_22 = arith.constant 0 : index
    %c0_23 = arith.constant 0 : index
    %c0_24 = arith.constant 0 : index
    %35 = vector.load %arg6[%c0_22, %c0_23, %c0_24] : memref<3x1x128xf32, #tpu.memory_space<vmem>>, vector<1x1x128xf32>
    %36 = vector.shape_cast %35 : vector<1x1x128xf32> to vector<1x128xf32>
    %37 = arith.mulf %19, %34 : vector<1x128xf32>
    %38 = arith.subf %36, %37 : vector<1x128xf32>
    %39 = vector.broadcast %34 : vector<1x128xf32> to vector<2x128xf32>
    %40 = arith.mulf %15, %39 : vector<2x128xf32>
    %41 = vector.broadcast %38 : vector<1x128xf32> to vector<2x128xf32>
    %42 = arith.addf %40, %41 : vector<2x128xf32>
    %cst_25 = arith.constant 0.000000e+00 : f32
    %43 = vector.broadcast %cst_25 : f32 to vector<2x128xf32>
    %44 = arith.maximumf %42, %43 : vector<2x128xf32>
    %c1 = arith.constant 1 : index
    %c0_26 = arith.constant 0 : index
    %c0_27 = arith.constant 0 : index
    %45 = vector.load %arg3[%c1, %c0_26, %c0_27] : memref<3x128x128xf32, #tpu.memory_space<vmem>>, vector<1x128x128xf32>
    %46 = vector.shape_cast %45 : vector<1x128x128xf32> to vector<128x128xf32>
    %cst_28 = arith.constant dense<0.000000e+00> : vector<2x128xf32>
    %47 = tpu.matmul %44, %46, %cst_28 {dimension_numbers = #tpu.dot_dimension_numbers<[1], [0], [0], [1], [0, 0, 1, 1], [], []>} : vector<2x128xf32>, vector<128x128xf32>, vector<2x128xf32> -> vector<2x128xf32>
    %c1_29 = arith.constant 1 : index
    %c0_30 = arith.constant 0 : index
    %c0_31 = arith.constant 0 : index
    %48 = vector.load %arg4[%c1_29, %c0_30, %c0_31] : memref<3x1x128xf32, #tpu.memory_space<vmem>>, vector<1x1x128xf32>
    %49 = vector.shape_cast %48 : vector<1x1x128xf32> to vector<1x128xf32>
    %50 = vector.broadcast %49 : vector<1x128xf32> to vector<2x128xf32>
    %51 = arith.addf %47, %50 : vector<2x128xf32>
    %52 = arith.addf %51, %44 : vector<2x128xf32>
    %cst_32 = arith.constant dense<0.000000e+00> : vector<128xf32>
    %53 = vector.multi_reduction <add>, %52, %cst_32 [0] : vector<2x128xf32> to vector<128xf32>
    %54 = vector.shape_cast %53 : vector<128xf32> to vector<1x128xf32>
    %cst_33 = arith.constant 5.000000e-01 : f32
    %55 = vector.broadcast %cst_33 : f32 to vector<1x128xf32>
    %56 = arith.mulf %54, %55 : vector<1x128xf32>
    %57 = arith.mulf %52, %52 : vector<2x128xf32>
    %cst_34 = arith.constant dense<0.000000e+00> : vector<128xf32>
    %58 = vector.multi_reduction <add>, %57, %cst_34 [0] : vector<2x128xf32> to vector<128xf32>
    %59 = vector.shape_cast %58 : vector<128xf32> to vector<1x128xf32>
    %cst_35 = arith.constant 5.000000e-01 : f32
    %60 = vector.broadcast %cst_35 : f32 to vector<1x128xf32>
    %61 = arith.mulf %59, %60 : vector<1x128xf32>
    %62 = arith.mulf %56, %56 : vector<1x128xf32>
    %63 = arith.subf %61, %62 : vector<1x128xf32>
    %cst_36 = arith.constant 0.000000e+00 : f32
    %64 = vector.broadcast %cst_36 : f32 to vector<1x128xf32>
    %65 = arith.maximumf %63, %64 : vector<1x128xf32>
    %c1_37 = arith.constant 1 : index
    %c0_38 = arith.constant 0 : index
    %c0_39 = arith.constant 0 : index
    %66 = vector.load %arg5[%c1_37, %c0_38, %c0_39] : memref<3x1x128xf32, #tpu.memory_space<vmem>>, vector<1x1x128xf32>
    %67 = vector.shape_cast %66 : vector<1x1x128xf32> to vector<1x128xf32>
    %cst_40 = arith.constant 9.99999974E-6 : f32
    %68 = vector.broadcast %cst_40 : f32 to vector<1x128xf32>
    %69 = arith.addf %65, %68 : vector<1x128xf32>
    %70 = math.rsqrt %69 : vector<1x128xf32>
    %71 = arith.mulf %67, %70 : vector<1x128xf32>
    %c1_41 = arith.constant 1 : index
    %c0_42 = arith.constant 0 : index
    %c0_43 = arith.constant 0 : index
    %72 = vector.load %arg6[%c1_41, %c0_42, %c0_43] : memref<3x1x128xf32, #tpu.memory_space<vmem>>, vector<1x1x128xf32>
    %73 = vector.shape_cast %72 : vector<1x1x128xf32> to vector<1x128xf32>
    %74 = arith.mulf %56, %71 : vector<1x128xf32>
    %75 = arith.subf %73, %74 : vector<1x128xf32>
    %76 = vector.broadcast %71 : vector<1x128xf32> to vector<2x128xf32>
    %77 = arith.mulf %52, %76 : vector<2x128xf32>
    %78 = vector.broadcast %75 : vector<1x128xf32> to vector<2x128xf32>
    %79 = arith.addf %77, %78 : vector<2x128xf32>
    %cst_44 = arith.constant 0.000000e+00 : f32
    %80 = vector.broadcast %cst_44 : f32 to vector<2x128xf32>
    %81 = arith.maximumf %79, %80 : vector<2x128xf32>
    %c2 = arith.constant 2 : index
    %c0_45 = arith.constant 0 : index
    %c0_46 = arith.constant 0 : index
    %82 = vector.load %arg3[%c2, %c0_45, %c0_46] : memref<3x128x128xf32, #tpu.memory_space<vmem>>, vector<1x128x128xf32>
    %83 = vector.shape_cast %82 : vector<1x128x128xf32> to vector<128x128xf32>
    %cst_47 = arith.constant dense<0.000000e+00> : vector<2x128xf32>
    %84 = tpu.matmul %81, %83, %cst_47 {dimension_numbers = #tpu.dot_dimension_numbers<[1], [0], [0], [1], [0, 0, 1, 1], [], []>} : vector<2x128xf32>, vector<128x128xf32>, vector<2x128xf32> -> vector<2x128xf32>
    %c2_48 = arith.constant 2 : index
    %c0_49 = arith.constant 0 : index
    %c0_50 = arith.constant 0 : index
    %85 = vector.load %arg4[%c2_48, %c0_49, %c0_50] : memref<3x1x128xf32, #tpu.memory_space<vmem>>, vector<1x1x128xf32>
    %86 = vector.shape_cast %85 : vector<1x1x128xf32> to vector<1x128xf32>
    %87 = vector.broadcast %86 : vector<1x128xf32> to vector<2x128xf32>
    %88 = arith.addf %84, %87 : vector<2x128xf32>
    %89 = arith.addf %88, %81 : vector<2x128xf32>
    %cst_51 = arith.constant dense<0.000000e+00> : vector<128xf32>
    %90 = vector.multi_reduction <add>, %89, %cst_51 [0] : vector<2x128xf32> to vector<128xf32>
    %91 = vector.shape_cast %90 : vector<128xf32> to vector<1x128xf32>
    %cst_52 = arith.constant 5.000000e-01 : f32
    %92 = vector.broadcast %cst_52 : f32 to vector<1x128xf32>
    %93 = arith.mulf %91, %92 : vector<1x128xf32>
    %94 = arith.mulf %89, %89 : vector<2x128xf32>
    %cst_53 = arith.constant dense<0.000000e+00> : vector<128xf32>
    %95 = vector.multi_reduction <add>, %94, %cst_53 [0] : vector<2x128xf32> to vector<128xf32>
    %96 = vector.shape_cast %95 : vector<128xf32> to vector<1x128xf32>
    %cst_54 = arith.constant 5.000000e-01 : f32
    %97 = vector.broadcast %cst_54 : f32 to vector<1x128xf32>
    %98 = arith.mulf %96, %97 : vector<1x128xf32>
    %99 = arith.mulf %93, %93 : vector<1x128xf32>
    %100 = arith.subf %98, %99 : vector<1x128xf32>
    %cst_55 = arith.constant 0.000000e+00 : f32
    %101 = vector.broadcast %cst_55 : f32 to vector<1x128xf32>
    %102 = arith.maximumf %100, %101 : vector<1x128xf32>
    %c2_56 = arith.constant 2 : index
    %c0_57 = arith.constant 0 : index
    %c0_58 = arith.constant 0 : index
    %103 = vector.load %arg5[%c2_56, %c0_57, %c0_58] : memref<3x1x128xf32, #tpu.memory_space<vmem>>, vector<1x1x128xf32>
    %104 = vector.shape_cast %103 : vector<1x1x128xf32> to vector<1x128xf32>
    %cst_59 = arith.constant 9.99999974E-6 : f32
    %105 = vector.broadcast %cst_59 : f32 to vector<1x128xf32>
    %106 = arith.addf %102, %105 : vector<1x128xf32>
    %107 = math.rsqrt %106 : vector<1x128xf32>
    %108 = arith.mulf %104, %107 : vector<1x128xf32>
    %c2_60 = arith.constant 2 : index
    %c0_61 = arith.constant 0 : index
    %c0_62 = arith.constant 0 : index
    %109 = vector.load %arg6[%c2_60, %c0_61, %c0_62] : memref<3x1x128xf32, #tpu.memory_space<vmem>>, vector<1x1x128xf32>
    %110 = vector.shape_cast %109 : vector<1x1x128xf32> to vector<1x128xf32>
    %111 = arith.mulf %93, %108 : vector<1x128xf32>
    %112 = arith.subf %110, %111 : vector<1x128xf32>
    %113 = vector.broadcast %108 : vector<1x128xf32> to vector<2x128xf32>
    %114 = arith.mulf %89, %113 : vector<2x128xf32>
    %115 = vector.broadcast %112 : vector<1x128xf32> to vector<2x128xf32>
    %116 = arith.addf %114, %115 : vector<2x128xf32>
    %cst_63 = arith.constant 0.000000e+00 : f32
    %117 = vector.broadcast %cst_63 : f32 to vector<2x128xf32>
    %118 = arith.maximumf %116, %117 : vector<2x128xf32>
    %c0_64 = arith.constant 0 : index
    %c0_65 = arith.constant 0 : index
    %119 = vector.load %arg7[%c0_64, %c0_65] : memref<128x128xf32, #tpu.memory_space<vmem>>, vector<128x128xf32>
    %cst_66 = arith.constant dense<0.000000e+00> : vector<2x128xf32>
    %120 = tpu.matmul %118, %119, %cst_66 {dimension_numbers = #tpu.dot_dimension_numbers<[1], [0], [0], [1], [0, 0, 1, 1], [], []>} : vector<2x128xf32>, vector<128x128xf32>, vector<2x128xf32> -> vector<2x128xf32>
    %c0_67 = arith.constant 0 : index
    %c0_68 = arith.constant 0 : index
    %121 = vector.load %arg8[%c0_67, %c0_68] : memref<1x128xf32, #tpu.memory_space<vmem>>, vector<1x128xf32>
    %122 = vector.broadcast %121 : vector<1x128xf32> to vector<2x128xf32>
    %123 = arith.addf %120, %122 : vector<2x128xf32>
    %124 = tpu.iota {dimensions = array<i32: 1>} : vector<2x128xi32>
    %c8_i32 = arith.constant 8 : i32
    %125 = vector.broadcast %c8_i32 : i32 to vector<2x128xi32>
    %126 = arith.cmpi slt, %124, %125 : vector<2x128xi32>
    %c8_i32_69 = arith.constant 8 : i32
    %127 = vector.broadcast %c8_i32_69 : i32 to vector<2x128xi32>
    %128 = arith.cmpi eq, %124, %127 : vector<2x128xi32>
    %cst_70 = arith.constant 0xFF800000 : f32
    %129 = vector.broadcast %cst_70 : f32 to vector<2x128xf32>
    %130 = arith.select %126, %123, %129 : vector<2x128xi1>, vector<2x128xf32>
    %cst_71 = arith.constant dense<0xFF800000> : vector<2xf32>
    %131 = vector.multi_reduction <maximumf>, %130, %cst_71 [1] : vector<2x128xf32> to vector<2xf32>
    %132 = vector.shape_cast %131 : vector<2xf32> to vector<2x1xf32>
    %133 = vector.shape_cast %132 : vector<2x1xf32> to vector<2x1xf32>
    %134 = vector.broadcast %133 : vector<2x1xf32> to vector<2x128xf32>
    %135 = arith.select %126, %123, %134 : vector<2x128xi1>, vector<2x128xf32>
    %136 = vector.broadcast %132 : vector<2x1xf32> to vector<2x128xf32>
    %137 = arith.subf %135, %136 : vector<2x128xf32>
    %138 = math.exp %137 : vector<2x128xf32>
    %cst_72 = arith.constant 0.000000e+00 : f32
    %139 = vector.broadcast %cst_72 : f32 to vector<2x128xf32>
    %140 = arith.select %126, %138, %139 : vector<2x128xi1>, vector<2x128xf32>
    %cst_73 = arith.constant dense<0.000000e+00> : vector<2xf32>
    %141 = vector.multi_reduction <add>, %140, %cst_73 [1] : vector<2x128xf32> to vector<2xf32>
    %142 = vector.shape_cast %141 : vector<2xf32> to vector<2x1xf32>
    %143 = tpu.reciprocal %142 : vector<2x1xf32> -> vector<2x1xf32>
    %144 = vector.broadcast %143 : vector<2x1xf32> to vector<2x128xf32>
    %145 = arith.mulf %140, %144 : vector<2x128xf32>
    %cst_74 = arith.constant 0.000000e+00 : f32
    %146 = vector.broadcast %cst_74 : f32 to vector<2x128xf32>
    %147 = arith.select %128, %123, %146 : vector<2x128xi1>, vector<2x128xf32>
    %cst_75 = arith.constant dense<0.000000e+00> : vector<2xf32>
    %148 = vector.multi_reduction <add>, %147, %cst_75 [1] : vector<2x128xf32> to vector<2xf32>
    %149 = vector.shape_cast %148 : vector<2xf32> to vector<2x1xf32>
    %150 = math.tanh %149 : vector<2x1xf32>
    %151 = vector.shape_cast %150 : vector<2x1xf32> to vector<2x1xf32>
    %152 = vector.broadcast %151 : vector<2x1xf32> to vector<2x128xf32>
    %153 = arith.select %128, %152, %145 : vector<2x128xi1>, vector<2x128xf32>
    %c0_76 = arith.constant 0 : index
    %c0_77 = arith.constant 0 : index
    %154 = vector.load %arg9[%c0_76, %c0_77] : memref<2x128xf32, #tpu.memory_space<vmem>>, vector<2x128xf32>
    tpu.vector_store %arg9[%c0_76, %c0_77], %153 {strides = array<i32>} : memref<2x128xf32, #tpu.memory_space<vmem>>, vector<2x128xf32>,
    return
  }
}

</mosaic_0001>

<llo_original>
// kernel: tpu_custom_call.1
$region0: #{tpu_custom_call.1}
  #allocation0 [shape = 'u32[]', space=smem, size = 0x4, offset = 0x4, fixed_abs, tag = 'smem constant byte address 0x4 - core index']
  #allocation1 [shape = 'u32[144,128]{1,0:T(1,128)}', space=vmem, size = 0x12000, scoped, tag = 'internal scratch']
  %s0 = inlined_call_operand.hbm [shape: f32[2,16], index: 0, kind: input, shape index: {}]
  %s1 = inlined_call_operand.hbm [shape: f32[16,128], index: 1, kind: input, shape index: {}]
  %s2 = inlined_call_operand.vmem [shape: f32[1,128], index: 2, kind: input, shape index: {}]
  %s3 = inlined_call_operand.hbm [shape: f32[3,128,128], index: 3, kind: input, shape index: {}]
  %s4 = inlined_call_operand.vmem [shape: f32[3,1,128], index: 4, kind: input, shape index: {}]
  %s5 = inlined_call_operand.vmem [shape: f32[3,1,128], index: 5, kind: input, shape index: {}]
  %s6 = inlined_call_operand.vmem [shape: f32[3,1,128], index: 6, kind: input, shape index: {}]
  %s7 = inlined_call_operand.hbm [shape: f32[128,128], index: 7, kind: input, shape index: {}]
  %s8 = inlined_call_operand.vmem [shape: f32[1,128], index: 8, kind: input, shape index: {}]
  %s9 = inlined_call_operand.hbm [shape: f32[2,128], index: 9, kind: output, shape index: {}]
  %s10 = sld [smem:[#allocation0]]
  $region62: #{tpu_custom_call.1} parent=0
    _
  %s12 = ssub.s32 1, %s10
  %s13 = scalar_select 0, %s12, %s10
  $region1: #{tpu_custom_call.1} parent=0
    #allocation2 [shape = 'u8[1024]{0}', space=vmem, size = 0x400, scoped, tag = 'input window, operand 0, single buffered']
    #allocation3 [shape = 's32[1]{0}', space=sflag, size = 0x4, scoped, tag = 'scoped memory for tpu_custom_call.1']
    #allocation4 [shape = 's32[1]{0}', space=sflag, size = 0x4, scoped, tag = 'scoped memory for tpu_custom_call.1']
    #allocation5 [shape = 'u8[8192]{0}', space=vmem, size = 0x2000, scoped, tag = 'input window, operand 1, single buffered']
    #allocation6 [shape = 's32[1]{0}', space=sflag, size = 0x4, scoped, tag = 'scoped memory for tpu_custom_call.1']
    #allocation7 [shape = 'u8[196608]{0}', space=vmem, size = 0x30000, scoped, tag = 'input window, operand 3, single buffered']
    #allocation8 [shape = 'u8[65536]{0}', space=vmem, size = 0x10000, scoped, tag = 'input window, operand 7, single buffered']
    #allocation9 [shape = 's32[1]{0}', space=sflag, size = 0x4, scoped, tag = 'scoped memory for tpu_custom_call.1']
    #allocation10 [shape = 'u8[1024]{0}', space=vmem, size = 0x400, scoped, tag = 'output window, operand 0, single buffered']
    %14 = vsyncpa [#allocation3], 0
    %15 = vsyncpa [#allocation6], 0
    %16 = vsyncpa [#allocation9], 0
    %17 = vsyncpa [#allocation4], 0
    // Predicated region
    $region2: #{tpu_custom_call.1} parent=1 // pred_check
      _
    $region3: #{tpu_custom_call.1} parent=1 // pred_check_branch
      %19 = sbr.rel (0) target = $region5
    $region4: #{tpu_custom_call.1} parent=1 // pred_region
      %s21 = ssub.s32 32, 32
      %22 = vsyncadd [#allocation3], %s21
      %s24 = sshll.u32 [#allocation2], 4
      %s25 = int_to_ptr.vmem [resolvable:$true] %s24
      %27 = dma.hbm_to_vmem [thread:$0]  %s0, 32, %s25, [#allocation3]
    $region5: #{tpu_custom_call.1} parent=1 // pred_fallthru
      _
    // Predicated region
    $region6: #{tpu_custom_call.1} parent=1 // pred_check
      _
    $region7: #{tpu_custom_call.1} parent=1 // pred_check_branch
      %29 = sbr.rel (0) target = $region9
    $region8: #{tpu_custom_call.1} parent=1 // pred_region
      %s31 = ssub.s32 256, 256
      %32 = vsyncadd [#allocation6], %s31
      %s33 = sshll.u32 [#allocation5], 4
      %s34 = int_to_ptr.vmem [resolvable:$true] %s33
      %39 = dma.hbm_to_vmem [thread:$0]  %s1, 256, %s34, [#allocation6], 128, 128, 8
    $region9: #{tpu_custom_call.1} parent=1 // pred_fallthru
      _
    // Predicated region
    $region10: #{tpu_custom_call.1} parent=1 // pred_check
      _
    $region11: #{tpu_custom_call.1} parent=1 // pred_check_branch
      %41 = sbr.rel (0) target = $region13
    $region12: #{tpu_custom_call.1} parent=1 // pred_region
      _
    $region13: #{tpu_custom_call.1} parent=1 // pred_fallthru
      _
    // Predicated region
    $region14: #{tpu_custom_call.1} parent=1 // pred_check
      _
    $region15: #{tpu_custom_call.1} parent=1 // pred_check_branch
      %43 = sbr.rel (0) target = $region17
    $region16: #{tpu_custom_call.1} parent=1 // pred_region
      %s45 = ssub.s32 6144, 6144
      %46 = vsyncadd [#allocation6], %s45
      %s47 = sshll.u32 [#allocation7], 4
      %s48 = int_to_ptr.vmem [resolvable:$true] %s47
      %53 = dma.hbm_to_vmem [thread:$0]  %s3, 6144, %s48, [#allocation6], 128, 128, 8
    $region17: #{tpu_custom_call.1} parent=1 // pred_fallthru
      _
    // Predicated region
    $region18: #{tpu_custom_call.1} parent=1 // pred_check
      _
    $region19: #{tpu_custom_call.1} parent=1 // pred_check_branch
      %55 = sbr.rel (0) target = $region21
    $region20: #{tpu_custom_call.1} parent=1 // pred_region
      _
    $region21: #{tpu_custom_call.1} parent=1 // pred_fallthru
      _
    // Predicated region
    $region22: #{tpu_custom_call.1} parent=1 // pred_check
      _
    $region23: #{tpu_custom_call.1} parent=1 // pred_check_branch
      %57 = sbr.rel (0) target = $region25
    $region24: #{tpu_custom_call.1} parent=1 // pred_region
      _
    $region25: #{tpu_custom_call.1} parent=1 // pred_fallthru
      _
    // Predicated region
    $region26: #{tpu_custom_call.1} parent=1 // pred_check
      _
    $region27: #{tpu_custom_call.1} parent=1 // pred_check_branch
      %59 = sbr.rel (0) target = $region29
    $region28: #{tpu_custom_call.1} parent=1 // pred_region
      _
    $region29: #{tpu_custom_call.1} parent=1 // pred_fallthru
      _
    // Predicated region
    $region30: #{tpu_custom_call.1} parent=1 // pred_check
      _
    $region31: #{tpu_custom_call.1} parent=1 // pred_check_branch
      %61 = sbr.rel (0) target = $region33
    $region32: #{tpu_custom_call.1} parent=1 // pred_region
      %s63 = ssub.s32 2048, 2048
      %64 = vsyncadd [#allocation9], %s63
      %s65 = sshll.u32 [#allocation8], 4
      %s66 = int_to_ptr.vmem [resolvable:$true] %s65
      %71 = dma.hbm_to_vmem [thread:$0]  %s7, 2048, %s66, [#allocation9], 128, 128, 8
    $region33: #{tpu_custom_call.1} parent=1 // pred_fallthru
      _
    // Predicated region
    $region34: #{tpu_custom_call.1} parent=1 // pred_check
      _
    $region35: #{tpu_custom_call.1} parent=1 // pred_check_branch
      %73 = sbr.rel (0) target = $region37
    $region36: #{tpu_custom_call.1} parent=1 // pred_region
      _
    $region37: #{tpu_custom_call.1} parent=1 // pred_fallthru
      _
    // Predicated region
    $region38: #{tpu_custom_call.1} parent=1 // pred_check
      _
    $region39: #{tpu_custom_call.1} parent=1 // pred_check_branch
      %75 = sbr.rel (0) target = $region41
    $region40: #{tpu_custom_call.1} parent=1 // pred_region
      %76 = dma.done [#allocation3], 32
    $region41: #{tpu_custom_call.1} parent=1 // pred_fallthru
      _
    // Predicated region
    $region42: #{tpu_custom_call.1} parent=1 // pred_check
      _
    $region43: #{tpu_custom_call.1} parent=1 // pred_check_branch
      %78 = sbr.rel (0) target = $region45
    $region44: #{tpu_custom_call.1} parent=1 // pred_region
      %79 = dma.done [#allocation6], 256
    $region45: #{tpu_custom_call.1} parent=1 // pred_fallthru
      _
    // Predicated region
    $region46: #{tpu_custom_call.1} parent=1 // pred_check
      _
    $region47: #{tpu_custom_call.1} parent=1 // pred_check_branch
      %81 = sbr.rel (0) target = $region49
    $region48: #{tpu_custom_call.1} parent=1 // pred_region
      %82 = dma.done [#allocation6], 6144
    $region49: #{tpu_custom_call.1} parent=1 // pred_fallthru
      _
    // Predicated region
    $region50: #{tpu_custom_call.1} parent=1 // pred_check
      _
    $region51: #{tpu_custom_call.1} parent=1 // pred_check_branch
      %84 = sbr.rel (0) target = $region53
    $region52: #{tpu_custom_call.1} parent=1 // pred_region
      %85 = dma.done [#allocation9], 2048
    $region53: #{tpu_custom_call.1} parent=1 // pred_fallthru
      _
    %v86 = vld [vmem:[#allocation2] sm:$0x3]
    %v87 = vld [vmem:[#allocation5] sm:$0xff]
    %v88 = vld [vmem:[#allocation5 + $0x8] sm:$0xff]
    %v89 = vld [vmem:[%s2] sm:$0x1]
    %v91 = vlaneseq
    %v92 = vshrl.u32 %v91, 7
    %v93 = vsub.s32 0, %v92
    %v94 = vrot.slane %v89, %v93
    %vm96 = vcmask 130048
    %v98 = vsel %vm96, %v86, 0
    %100 = vmatprep.subr.mxu0 0.0
    %101 = vmatpush1.msra.mxu0 %v87
    %102 = vmatprep.subr.mxu0 0.0
    %103 = vmatpush1.msra.mxu0 %v88
    %104 = vmatprep.subr.mxu0 0.0
    %105 = vmatpush1.msra.mxu0 0.0
    %106 = vmatprep.subr.mxu0 0.0
    %107 = vmatpush1.msra.mxu0 0.0
    %108 = vmatprep.subr.mxu0 0.0
    %109 = vmatpush1.msra.mxu0 0.0
    %110 = vmatprep.subr.mxu0 0.0
    %111 = vmatpush1.msra.mxu0 0.0
    %112 = vmatprep.subr.mxu0 0.0
    %113 = vmatpush1.msra.mxu0 0.0
    %114 = vmatprep.subr.mxu0 0.0
    %115 = vmatpush1.msra.mxu0 0.0
    %116 = vmatprep.subr.mxu0 0.0
    %117 = vmatpush1.msra.mxu0 0.0
    %118 = vmatprep.subr.mxu0 0.0
    %119 = vmatpush1.msra.mxu0 0.0
    %120 = vmatprep.subr.mxu0 0.0
    %121 = vmatpush1.msra.mxu0 0.0
    %122 = vmatprep.subr.mxu0 0.0
    %123 = vmatpush1.msra.mxu0 0.0
    %124 = vmatprep.subr.mxu0 0.0
    %125 = vmatpush1.msra.mxu0 0.0
    %126 = vmatprep.subr.mxu0 0.0
    %127 = vmatpush1.msra.mxu0 0.0
    %128 = vmatprep.subr.mxu0 0.0
    %129 = vmatpush1.msra.mxu0 0.0
    %130 = vmatprep.subr.mxu0 0.0
    %131 = vmatpush1.msra.mxu0 0.0
    %132 = vmatprep.subr.mxu0 0.0
    %133 = vmatpush1.msra.mxu0 0.0
    %134 = vmatprep.subr.mxu0 0.0
    %135 = vmatpush1.msra.mxu0 0.0
    %136 = vmatprep.subr.mxu0 0.0
    %137 = vmatpush1.msra.mxu0 0.0
    %138 = vmatprep.subr.mxu0 0.0
    %139 = vmatpush1.msra.mxu0 0.0
    %140 = vmatprep.subr.mxu0 0.0
    %141 = vmatpush1.msra.mxu0 0.0
    %142 = vmatprep.subr.mxu0 0.0
    %143 = vmatpush1.msra.mxu0 0.0
    %144 = vmatprep.subr.mxu0 0.0
    %145 = vmatpush1.msra.mxu0 0.0
    %146 = vmatprep.subr.mxu0 0.0
    %147 = vmatpush1.msra.mxu0 0.0
    %148 = vmatprep.subr.mxu0 0.0
    %149 = vmatpush1.msra.mxu0 0.0
    %150 = vmatprep.subr.mxu0 0.0
    %151 = vmatpush1.msra.mxu0 0.0
    %152 = vmatprep.subr.mxu0 0.0
    %153 = vmatpush1.msra.mxu0 0.0
    %154 = vmatprep.subr.mxu0 0.0
    %155 = vmatpush1.msra.mxu0 0.0
    %156 = vmatprep.subr.mxu0 0.0
    %157 = vmatpush1.msra.mxu0 0.0
    %158 = vmatprep.subr.mxu0 0.0
    %159 = vmatpush1.msra.mxu0 0.0
    %160 = vmatprep.subr.mxu0 0.0
    %161 = vmatpush1.msra.mxu0 0.0
    %162 = vmatprep.subr.mxu0 0.0
    %163 = vmatpush1.msra.mxu0 0.0
    %164 = vmatprep.mubr.f32.mxu0 0.0
    %165 = vmatmul.mubr.f32.gmra.mrb[0].mxu0 %v98
    %v166 = vpop.f32.mrb[0].mxu0
    %v167 = vadd.f32 %v94, %v166
    %v168 = vpop.f32.mrb[0].mxu0
    %169 = vdwg.mxu0
    %v170 = vmax.f32 %v167, 0.0
    %v171 = vld [vmem:[#allocation7] sm:$0xff]
    %v172 = vld [vmem:[#allocation7 + $0x8] sm:$0xff]
    %v173 = vld [vmem:[#allocation7 + $0x10] sm:$0xff]
    %v174 = vld [vmem:[#allocation7 + $0x18] sm:$0xff]
    %v175 = vld [vmem:[#allocation7 + $0x20] sm:$0xff]
    %v176 = vld [vmem:[#allocation7 + $0x28] sm:$0xff]
    %v177 = vld [vmem:[#allocation7 + $0x30] sm:$0xff]
    %v178 = vld [vmem:[#allocation7 + $0x38] sm:$0xff]
    %v179 = vld [vmem:[#allocation7 + $0x40] sm:$0xff]
    %v180 = vld [vmem:[#allocation7 + $0x48] sm:$0xff]
    %v181 = vld [vmem:[#allocation7 + $0x50] sm:$0xff]
    %v182 = vld [vmem:[#allocation7 + $0x58] sm:$0xff]
    %v183 = vld [vmem:[#allocation7 + $0x60] sm:$0xff]
    %v184 = vld [vmem:[#allocation7 + $0x68] sm:$0xff]
    %v185 = vld [vmem:[#allocation7 + $0x70] sm:$0xff]
    %v186 = vld [vmem:[#allocation7 + $0x78] sm:$0xff]
    %v187 = vld [vmem:[%s4] sm:$0x1]
    %v189 = vlaneseq
    %v190 = vshrl.u32 %v189, 7
    %v191 = vsub.s32 0, %v190
    %v192 = vrot.slane %v187, %v191
    %194 = vmatprep.subr.mxu0 0.0
    %195 = vmatpush1.msra.mxu0 %v171
    %196 = vmatprep.subr.mxu0 0.0
    %197 = vmatpush1.msra.mxu0 %v172
    %198 = vmatprep.subr.mxu0 0.0
    %199 = vmatpush1.msra.mxu0 %v173
    %200 = vmatprep.subr.mxu0 0.0
    %201 = vmatpush1.msra.mxu0 %v174
    %202 = vmatprep.subr.mxu0 0.0
    %203 = vmatpush1.msra.mxu0 %v175
    %204 = vmatprep.subr.mxu0 0.0
    %205 = vmatpush1.msra.mxu0 %v176
    %206 = vmatprep.subr.mxu0 0.0
    %207 = vmatpush1.msra.mxu0 %v177
    %208 = vmatprep.subr.mxu0 0.0
    %209 = vmatpush1.msra.mxu0 %v178
    %210 = vmatprep.subr.mxu0 0.0
    %211 = vmatpush1.msra.mxu0 %v179
    %212 = vmatprep.subr.mxu0 0.0
    %213 = vmatpush1.msra.mxu0 %v180
    %214 = vmatprep.subr.mxu0 0.0
    %215 = vmatpush1.msra.mxu0 %v181
    %216 = vmatprep.subr.mxu0 0.0
    %217 = vmatpush1.msra.mxu0 %v182
    %218 = vmatprep.subr.mxu0 0.0
    %219 = vmatpush1.msra.mxu0 %v183
    %220 = vmatprep.subr.mxu0 0.0
    %221 = vmatpush1.msra.mxu0 %v184
    %222 = vmatprep.subr.mxu0 0.0
    %223 = vmatpush1.msra.mxu0 %v185
    %224 = vmatprep.subr.mxu0 0.0
    %225 = vmatpush1.msra.mxu0 %v186
    %226 = vmatprep.subr.mxu0 0.0
    %227 = vmatpush1.msra.mxu0 0.0
    %228 = vmatprep.subr.mxu0 0.0
    %229 = vmatpush1.msra.mxu0 0.0
    %230 = vmatprep.subr.mxu0 0.0
    %231 = vmatpush1.msra.mxu0 0.0
    %232 = vmatprep.subr.mxu0 0.0
    %233 = vmatpush1.msra.mxu0 0.0
    %234 = vmatprep.subr.mxu0 0.0
    %235 = vmatpush1.msra.mxu0 0.0
    %236 = vmatprep.subr.mxu0 0.0
    %237 = vmatpush1.msra.mxu0 0.0
    %238 = vmatprep.subr.mxu0 0.0
    %239 = vmatpush1.msra.mxu0 0.0
    %240 = vmatprep.subr.mxu0 0.0
    %241 = vmatpush1.msra.mxu0 0.0
    %242 = vmatprep.subr.mxu0 0.0
    %243 = vmatpush1.msra.mxu0 0.0
    %244 = vmatprep.subr.mxu0 0.0
    %245 = vmatpush1.msra.mxu0 0.0
    %246 = vmatprep.subr.mxu0 0.0
    %247 = vmatpush1.msra.mxu0 0.0
    %248 = vmatprep.subr.mxu0 0.0
    %249 = vmatpush1.msra.mxu0 0.0
    %250 = vmatprep.subr.mxu0 0.0
    %251 = vmatpush1.msra.mxu0 0.0
    %252 = vmatprep.subr.mxu0 0.0
    %253 = vmatpush1.msra.mxu0 0.0
    %254 = vmatprep.subr.mxu0 0.0
    %255 = vmatpush1.msra.mxu0 0.0
    %256 = vmatprep.subr.mxu0 0.0
    %257 = vmatpush1.msra.mxu0 0.0
    %258 = vmatprep.mubr.f32.mxu0 0.0
    %259 = vmatmul.mubr.f32.gmra.mrb[0].mxu0 %v170
    %v260 = vpop.f32.mrb[0].mxu0
    %v261 = vadd.f32 %v192, %v260
    %v262 = vpop.f32.mrb[0].mxu0
    %263 = vdwg.mxu0
    %v264 = vadd.f32 %v261, %v170
    %vm265 = vcmask 1041408
    %v266 = vsel %vm265, %v264, 0.0
    %v267 = vrot.slane %v266, 4
    %v268 = vadd.f32 %v266, %v267
    %v269 = vrot.slane %v268, 2
    %v270 = vadd.f32 %v268, %v269
    %v271 = vrot.slane %v270, 1
    %v272 = vadd.f32 %v270, %v271
    %v273 = vmul.f32 %v272, 0.5
    %v274 = vmul.f32 %v264, %v264
    %v275 = vsel %vm265, %v274, 0.0
    %v276 = vrot.slane %v275, 4
    %v277 = vadd.f32 %v275, %v276
    %v278 = vrot.slane %v277, 2
    %v279 = vadd.f32 %v277, %v278
    %v280 = vrot.slane %v279, 1
    %v281 = vadd.f32 %v279, %v280
    %v282 = vmul.f32 %v281, 0.5
    %v283 = vmul.f32 %v273, %v273
    %v284 = vsub.f32 %v282, %v283
    %v285 = vmax.f32 %v284, 0.0
    %v286 = vld [vmem:[%s5] sm:$0x1]
    %v287 = vadd.f32 %v285, 1e-05
    %v288 = vrsqrt.pop %v287
    %v289 = vmul.f32 %v286, %v288
    %v290 = vld [vmem:[%s6] sm:$0x1]
    %v291 = vmul.f32 %v273, %v289
    %v292 = vsub.f32 %v290, %v291
    %v294 = vlaneseq
    %v295 = vshrl.u32 %v294, 7
    %v296 = vsub.s32 0, %v295
    %v297 = vrot.slane %v289, %v296
    %v299 = vmul.f32 %v264, %v297
    %v301 = vlaneseq
    %v302 = vshrl.u32 %v301, 7
    %v303 = vsub.s32 0, %v302
    %v304 = vrot.slane %v292, %v303
    %v306 = vadd.f32 %v299, %v304
    %v307 = vmax.f32 %v306, 0.0
    %s308 = scalar_lea.vmem [#allocation7], 128
    %v309 = vld [vmem:[%s308] sm:$0xff]
    %v310 = vld [vmem:[%s308 + $0x8] sm:$0xff]
    %v311 = vld [vmem:[%s308 + $0x10] sm:$0xff]
    %v312 = vld [vmem:[%s308 + $0x18] sm:$0xff]
    %v313 = vld [vmem:[%s308 + $0x20] sm:$0xff]
    %v314 = vld [vmem:[%s308 + $0x28] sm:$0xff]
    %v315 = vld [vmem:[%s308 + $0x30] sm:$0xff]
    %v316 = vld [vmem:[%s308 + $0x38] sm:$0xff]
    %v317 = vld [vmem:[%s308 + $0x40] sm:$0xff]
    %v318 = vld [vmem:[%s308 + $0x48] sm:$0xff]
    %v319 = vld [vmem:[%s308 + $0x50] sm:$0xff]
    %v320 = vld [vmem:[%s308 + $0x58] sm:$0xff]
    %v321 = vld [vmem:[%s308 + $0x60] sm:$0xff]
    %v322 = vld [vmem:[%s308 + $0x68] sm:$0xff]
    %v323 = vld [vmem:[%s308 + $0x70] sm:$0xff]
    %v324 = vld [vmem:[%s308 + $0x78] sm:$0xff]
    %s325 = scalar_lea.vmem %s4, 1
    %v326 = vld [vmem:[%s325] sm:$0x1]
    %v328 = vlaneseq
    %v329 = vshrl.u32 %v328, 7
    %v330 = vsub.s32 0, %v329
    %v331 = vrot.slane %v326, %v330
    %333 = vmatprep.subr.mxu0 0.0
    %334 = vmatpush1.msra.mxu0 %v309
    %335 = vmatprep.subr.mxu0 0.0
    %336 = vmatpush1.msra.mxu0 %v310
    %337 = vmatprep.subr.mxu0 0.0
    %338 = vmatpush1.msra.mxu0 %v311
    %339 = vmatprep.subr.mxu0 0.0
    %340 = vmatpush1.msra.mxu0 %v312
    %341 = vmatprep.subr.mxu0 0.0
    %342 = vmatpush1.msra.mxu0 %v313
    %343 = vmatprep.subr.mxu0 0.0
    %344 = vmatpush1.msra.mxu0 %v314
    %345 = vmatprep.subr.mxu0 0.0
    %346 = vmatpush1.msra.mxu0 %v315
    %347 = vmatprep.subr.mxu0 0.0
    %348 = vmatpush1.msra.mxu0 %v316
    %349 = vmatprep.subr.mxu0 0.0
    %350 = vmatpush1.msra.mxu0 %v317
    %351 = vmatprep.subr.mxu0 0.0
    %352 = vmatpush1.msra.mxu0 %v318
    %353 = vmatprep.subr.mxu0 0.0
    %354 = vmatpush1.msra.mxu0 %v319
    %355 = vmatprep.subr.mxu0 0.0
    %356 = vmatpush1.msra.mxu0 %v320
    %357 = vmatprep.subr.mxu0 0.0
    %358 = vmatpush1.msra.mxu0 %v321
    %359 = vmatprep.subr.mxu0 0.0
    %360 = vmatpush1.msra.mxu0 %v322
    %361 = vmatprep.subr.mxu0 0.0
    %362 = vmatpush1.msra.mxu0 %v323
    %363 = vmatprep.subr.mxu0 0.0
    %364 = vmatpush1.msra.mxu0 %v324
    %365 = vmatprep.subr.mxu0 0.0
    %366 = vmatpush1.msra.mxu0 0.0
    %367 = vmatprep.subr.mxu0 0.0
    %368 = vmatpush1.msra.mxu0 0.0
    %369 = vmatprep.subr.mxu0 0.0
    %370 = vmatpush1.msra.mxu0 0.0
    %371 = vmatprep.subr.mxu0 0.0
    %372 = vmatpush1.msra.mxu0 0.0
    %373 = vmatprep.subr.mxu0 0.0
    %374 = vmatpush1.msra.mxu0 0.0
    %375 = vmatprep.subr.mxu0 0.0
    %376 = vmatpush1.msra.mxu0 0.0
    %377 = vmatprep.subr.mxu0 0.0
    %378 = vmatpush1.msra.mxu0 0.0
    %379 = vmatprep.subr.mxu0 0.0
    %380 = vmatpush1.msra.mxu0 0.0
    %381 = vmatprep.subr.mxu0 0.0
    %382 = vmatpush1.msra.mxu0 0.0
    %383 = vmatprep.subr.mxu0 0.0
    %384 = vmatpush1.msra.mxu0 0.0
    %385 = vmatprep.subr.mxu0 0.0
    %386 = vmatpush1.msra.mxu0 0.0
    %387 = vmatprep.subr.mxu0 0.0
    %388 = vmatpush1.msra.mxu0 0.0
    %389 = vmatprep.subr.mxu0 0.0
    %390 = vmatpush1.msra.mxu0 0.0
    %391 = vmatprep.subr.mxu0 0.0
    %392 = vmatpush1.msra.mxu0 0.0
    %393 = vmatprep.subr.mxu0 0.0
    %394 = vmatpush1.msra.mxu0 0.0
    %395 = vmatprep.subr.mxu0 0.0
    %396 = vmatpush1.msra.mxu0 0.0
    %397 = vmatprep.mubr.f32.mxu0 0.0
    %398 = vmatmul.mubr.f32.gmra.mrb[0].mxu0 %v307
    %v399 = vpop.f32.mrb[0].mxu0
    %v400 = vadd.f32 %v331, %v399
    %v401 = vpop.f32.mrb[0].mxu0
    %402 = vdwg.mxu0
    %v403 = vadd.f32 %v400, %v307
    %v404 = vsel %vm265, %v403, 0.0
    %v405 = vrot.slane %v404, 4
    %v406 = vadd.f32 %v404, %v405
    %v407 = vrot.slane %v406, 2
    %v408 = vadd.f32 %v406, %v407
    %v409 = vrot.slane %v408, 1
    %v410 = vadd.f32 %v408, %v409
    %v411 = vmul.f32 %v410, 0.5
    %v412 = vmul.f32 %v403, %v403
    %v413 = vsel %vm265, %v412, 0.0
    %v414 = vrot.slane %v413, 4
    %v415 = vadd.f32 %v413, %v414
    %v416 = vrot.slane %v415, 2
    %v417 = vadd.f32 %v415, %v416
    %v418 = vrot.slane %v417, 1
    %v419 = vadd.f32 %v417, %v418
    %v420 = vmul.f32 %v419, 0.5
    %v421 = vmul.f32 %v411, %v411
    %v422 = vsub.f32 %v420, %v421
    %v423 = vmax.f32 %v422, 0.0
    %s424 = scalar_lea.vmem %s5, 1
    %v425 = vld [vmem:[%s424] sm:$0x1]
    %v426 = vadd.f32 %v423, 1e-05
    %v427 = vrsqrt.pop %v426
    %v428 = vmul.f32 %v425, %v427
    %s429 = scalar_lea.vmem %s6, 1
    %v430 = vld [vmem:[%s429] sm:$0x1]
    %v431 = vmul.f32 %v411, %v428
    %v432 = vsub.f32 %v430, %v431
    %v434 = vlaneseq
    %v435 = vshrl.u32 %v434, 7
    %v436 = vsub.s32 0, %v435
    %v437 = vrot.slane %v428, %v436
    %v439 = vmul.f32 %v403, %v437
    %v441 = vlaneseq
    %v442 = vshrl.u32 %v441, 7
    %v443 = vsub.s32 0, %v442
    %v444 = vrot.slane %v432, %v443
    %v446 = vadd.f32 %v439, %v444
    %v447 = vmax.f32 %v446, 0.0
    %s448 = scalar_lea.vmem [#allocation7], 256
    %v449 = vld [vmem:[%s448] sm:$0xff]
    %v450 = vld [vmem:[%s448 + $0x8] sm:$0xff]
    %v451 = vld [vmem:[%s448 + $0x10] sm:$0xff]
    %v452 = vld [vmem:[%s448 + $0x18] sm:$0xff]
    %v453 = vld [vmem:[%s448 + $0x20] sm:$0xff]
    %v454 = vld [vmem:[%s448 + $0x28] sm:$0xff]
    %v455 = vld [vmem:[%s448 + $0x30] sm:$0xff]
    %v456 = vld [vmem:[%s448 + $0x38] sm:$0xff]
    %v457 = vld [vmem:[%s448 + $0x40] sm:$0xff]
    %v458 = vld [vmem:[%s448 + $0x48] sm:$0xff]
    %v459 = vld [vmem:[%s448 + $0x50] sm:$0xff]
    %v460 = vld [vmem:[%s448 + $0x58] sm:$0xff]
    %v461 = vld [vmem:[%s448 + $0x60] sm:$0xff]
    %v462 = vld [vmem:[%s448 + $0x68] sm:$0xff]
    %v463 = vld [vmem:[%s448 + $0x70] sm:$0xff]
    %v464 = vld [vmem:[%s448 + $0x78] sm:$0xff]
    %s465 = scalar_lea.vmem %s4, 2
    %v466 = vld [vmem:[%s465] sm:$0x1]
    %v468 = vlaneseq
    %v469 = vshrl.u32 %v468, 7
    %v470 = vsub.s32 0, %v469
    %v471 = vrot.slane %v466, %v470
    %473 = vmatprep.subr.mxu0 0.0
    %474 = vmatpush1.msra.mxu0 %v449
    %475 = vmatprep.subr.mxu0 0.0
    %476 = vmatpush1.msra.mxu0 %v450
    %477 = vmatprep.subr.mxu0 0.0
    %478 = vmatpush1.msra.mxu0 %v451
    %479 = vmatprep.subr.mxu0 0.0
    %480 = vmatpush1.msra.mxu0 %v452
    %481 = vmatprep.subr.mxu0 0.0
    %482 = vmatpush1.msra.mxu0 %v453
    %483 = vmatprep.subr.mxu0 0.0
    %484 = vmatpush1.msra.mxu0 %v454
    %485 = vmatprep.subr.mxu0 0.0
    %486 = vmatpush1.msra.mxu0 %v455
    %487 = vmatprep.subr.mxu0 0.0
    %488 = vmatpush1.msra.mxu0 %v456
    %489 = vmatprep.subr.mxu0 0.0
    %490 = vmatpush1.msra.mxu0 %v457
    %491 = vmatprep.subr.mxu0 0.0
    %492 = vmatpush1.msra.mxu0 %v458
    %493 = vmatprep.subr.mxu0 0.0
    %494 = vmatpush1.msra.mxu0 %v459
    %495 = vmatprep.subr.mxu0 0.0
    %496 = vmatpush1.msra.mxu0 %v460
    %497 = vmatprep.subr.mxu0 0.0
    %498 = vmatpush1.msra.mxu0 %v461
    %499 = vmatprep.subr.mxu0 0.0
    %500 = vmatpush1.msra.mxu0 %v462
    %501 = vmatprep.subr.mxu0 0.0
    %502 = vmatpush1.msra.mxu0 %v463
    %503 = vmatprep.subr.mxu0 0.0
    %504 = vmatpush1.msra.mxu0 %v464
    %505 = vmatprep.subr.mxu0 0.0
    %506 = vmatpush1.msra.mxu0 0.0
    %507 = vmatprep.subr.mxu0 0.0
    %508 = vmatpush1.msra.mxu0 0.0
    %509 = vmatprep.subr.mxu0 0.0
    %510 = vmatpush1.msra.mxu0 0.0
    %511 = vmatprep.subr.mxu0 0.0
    %512 = vmatpush1.msra.mxu0 0.0
    %513 = vmatprep.subr.mxu0 0.0
    %514 = vmatpush1.msra.mxu0 0.0
    %515 = vmatprep.subr.mxu0 0.0
    %516 = vmatpush1.msra.mxu0 0.0
    %517 = vmatprep.subr.mxu0 0.0
    %518 = vmatpush1.msra.mxu0 0.0
    %519 = vmatprep.subr.mxu0 0.0
    %520 = vmatpush1.msra.mxu0 0.0
    %521 = vmatprep.subr.mxu0 0.0
    %522 = vmatpush1.msra.mxu0 0.0
    %523 = vmatprep.subr.mxu0 0.0
    %524 = vmatpush1.msra.mxu0 0.0
    %525 = vmatprep.subr.mxu0 0.0
    %526 = vmatpush1.msra.mxu0 0.0
    %527 = vmatprep.subr.mxu0 0.0
    %528 = vmatpush1.msra.mxu0 0.0
    %529 = vmatprep.subr.mxu0 0.0
    %530 = vmatpush1.msra.mxu0 0.0
    %531 = vmatprep.subr.mxu0 0.0
    %532 = vmatpush1.msra.mxu0 0.0
    %533 = vmatprep.subr.mxu0 0.0
    %534 = vmatpush1.msra.mxu0 0.0
    %535 = vmatprep.subr.mxu0 0.0
    %536 = vmatpush1.msra.mxu0 0.0
    %537 = vmatprep.mubr.f32.mxu0 0.0
    %538 = vmatmul.mubr.f32.gmra.mrb[0].mxu0 %v447
    %v539 = vpop.f32.mrb[0].mxu0
    %v540 = vadd.f32 %v471, %v539
    %v541 = vpop.f32.mrb[0].mxu0
    %542 = vdwg.mxu0
    %v543 = vadd.f32 %v540, %v447
    %v544 = vsel %vm265, %v543, 0.0
    %v545 = vrot.slane %v544, 4
    %v546 = vadd.f32 %v544, %v545
    %v547 = vrot.slane %v546, 2
    %v548 = vadd.f32 %v546, %v547
    %v549 = vrot.slane %v548, 1
    %v550 = vadd.f32 %v548, %v549
    %v551 = vmul.f32 %v550, 0.5
    %v552 = vmul.f32 %v543, %v543
    %v553 = vsel %vm265, %v552, 0.0
    %v554 = vrot.slane %v553, 4
    %v555 = vadd.f32 %v553, %v554
    %v556 = vrot.slane %v555, 2
    %v557 = vadd.f32 %v555, %v556
    %v558 = vrot.slane %v557, 1
    %v559 = vadd.f32 %v557, %v558
    %v560 = vmul.f32 %v559, 0.5
    %v561 = vmul.f32 %v551, %v551
    %v562 = vsub.f32 %v560, %v561
    %v563 = vmax.f32 %v562, 0.0
    %s564 = scalar_lea.vmem %s5, 2
    %v565 = vld [vmem:[%s564] sm:$0x1]
    %v566 = vadd.f32 %v563, 1e-05
    %v567 = vrsqrt.pop %v566
    %v568 = vmul.f32 %v565, %v567
    %s569 = scalar_lea.vmem %s6, 2
    %v570 = vld [vmem:[%s569] sm:$0x1]
    %v571 = vmul.f32 %v551, %v568
    %v572 = vsub.f32 %v570, %v571
    %v574 = vlaneseq
    %v575 = vshrl.u32 %v574, 7
    %v576 = vsub.s32 0, %v575
    %v577 = vrot.slane %v568, %v576
    %v579 = vmul.f32 %v543, %v577
    %v581 = vlaneseq
    %v582 = vshrl.u32 %v581, 7
    %v583 = vsub.s32 0, %v582
    %v584 = vrot.slane %v572, %v583
    %v586 = vadd.f32 %v579, %v584
    %v587 = vmax.f32 %v586, 0.0
    %v588 = vld [vmem:[#allocation8] sm:$0xff]
    %v589 = vld [vmem:[#allocation8 + $0x8] sm:$0xff]
    %v590 = vld [vmem:[#allocation8 + $0x10] sm:$0xff]
    %v591 = vld [vmem:[#allocation8 + $0x18] sm:$0xff]
    %v592 = vld [vmem:[#allocation8 + $0x20] sm:$0xff]
    %v593 = vld [vmem:[#allocation8 + $0x28] sm:$0xff]
    %v594 = vld [vmem:[#allocation8 + $0x30] sm:$0xff]
    %v595 = vld [vmem:[#allocation8 + $0x38] sm:$0xff]
    %v596 = vld [vmem:[#allocation8 + $0x40] sm:$0xff]
    %v597 = vld [vmem:[#allocation8 + $0x48] sm:$0xff]
    %v598 = vld [vmem:[#allocation8 + $0x50] sm:$0xff]
    %v599 = vld [vmem:[#allocation8 + $0x58] sm:$0xff]
    %v600 = vld [vmem:[#allocation8 + $0x60] sm:$0xff]
    %v601 = vld [vmem:[#allocation8 + $0x68] sm:$0xff]
    %v602 = vld [vmem:[#allocation8 + $0x70] sm:$0xff]
    %v603 = vld [vmem:[#allocation8 + $0x78] sm:$0xff]
    %v604 = vld [vmem:[%s8] sm:$0x1]
    %v606 = vlaneseq
    %v607 = vshrl.u32 %v606, 7
    %v608 = vsub.s32 0, %v607
    %v609 = vrot.slane %v604, %v608
    %611 = vmatprep.subr.mxu0 0.0
    %612 = vmatpush1.msra.mxu0 %v588
    %613 = vmatprep.subr.mxu0 0.0
    %614 = vmatpush1.msra.mxu0 %v589
    %615 = vmatprep.subr.mxu0 0.0
    %616 = vmatpush1.msra.mxu0 %v590
    %617 = vmatprep.subr.mxu0 0.0
    %618 = vmatpush1.msra.mxu0 %v591
    %619 = vmatprep.subr.mxu0 0.0
    %620 = vmatpush1.msra.mxu0 %v592
    %621 = vmatprep.subr.mxu0 0.0
    %622 = vmatpush1.msra.mxu0 %v593
    %623 = vmatprep.subr.mxu0 0.0
    %624 = vmatpush1.msra.mxu0 %v594
    %625 = vmatprep.subr.mxu0 0.0
    %626 = vmatpush1.msra.mxu0 %v595
    %627 = vmatprep.subr.mxu0 0.0
    %628 = vmatpush1.msra.mxu0 %v596
    %629 = vmatprep.subr.mxu0 0.0
    %630 = vmatpush1.msra.mxu0 %v597
    %631 = vmatprep.subr.mxu0 0.0
    %632 = vmatpush1.msra.mxu0 %v598
    %633 = vmatprep.subr.mxu0 0.0
    %634 = vmatpush1.msra.mxu0 %v599
    %635 = vmatprep.subr.mxu0 0.0
    %636 = vmatpush1.msra.mxu0 %v600
    %637 = vmatprep.subr.mxu0 0.0
    %638 = vmatpush1.msra.mxu0 %v601
    %639 = vmatprep.subr.mxu0 0.0
    %640 = vmatpush1.msra.mxu0 %v602
    %641 = vmatprep.subr.mxu0 0.0
    %642 = vmatpush1.msra.mxu0 %v603
    %643 = vmatprep.subr.mxu0 0.0
    %644 = vmatpush1.msra.mxu0 0.0
    %645 = vmatprep.subr.mxu0 0.0
    %646 = vmatpush1.msra.mxu0 0.0
    %647 = vmatprep.subr.mxu0 0.0
    %648 = vmatpush1.msra.mxu0 0.0
    %649 = vmatprep.subr.mxu0 0.0
    %650 = vmatpush1.msra.mxu0 0.0
    %651 = vmatprep.subr.mxu0 0.0
    %652 = vmatpush1.msra.mxu0 0.0
    %653 = vmatprep.subr.mxu0 0.0
    %654 = vmatpush1.msra.mxu0 0.0
    %655 = vmatprep.subr.mxu0 0.0
    %656 = vmatpush1.msra.mxu0 0.0
    %657 = vmatprep.subr.mxu0 0.0
    %658 = vmatpush1.msra.mxu0 0.0
    %659 = vmatprep.subr.mxu0 0.0
    %660 = vmatpush1.msra.mxu0 0.0
    %661 = vmatprep.subr.mxu0 0.0
    %662 = vmatpush1.msra.mxu0 0.0
    %663 = vmatprep.subr.mxu0 0.0
    %664 = vmatpush1.msra.mxu0 0.0
    %665 = vmatprep.subr.mxu0 0.0
    %666 = vmatpush1.msra.mxu0 0.0
    %667 = vmatprep.subr.mxu0 0.0
    %668 = vmatpush1.msra.mxu0 0.0
    %669 = vmatprep.subr.mxu0 0.0
    %670 = vmatpush1.msra.mxu0 0.0
    %671 = vmatprep.subr.mxu0 0.0
    %672 = vmatpush1.msra.mxu0 0.0
    %673 = vmatprep.subr.mxu0 0.0
    %674 = vmatpush1.msra.mxu0 0.0
    %675 = vmatprep.mubr.f32.mxu0 0.0
    %676 = vmatmul.mubr.f32.gmra.mrb[0].mxu0 %v587
    %v677 = vpop.f32.mrb[0].mxu0
    %v678 = vadd.f32 %v609, %v677
    %v679 = vpop.f32.mrb[0].mxu0
    %680 = vdwg.mxu0
    %v681 = vlaneseq
    %v682 = vand.u32 %v681, 127
    %vm683 = vcmp.lt.s32.totalorder %v682, 8
    %vm684 = vcmp.eq.s32.totalorder %v682, 8
    %v685 = vsel %vm683, %v678, -inf
    %v686 = vsel %vm265, %v685, -inf
    %687 = vmax.xlane.f32.xlu0 %v686
    %v688 = vpop.xlane.xlu0 %687
    %v689 = vsel %vm683, %v678, %v688
    %v690 = vsub.f32 %v689, %v688
    %v691 = vmul.f32 %v690, 1.442695
    %v692 = vpow.pop %v691
    %v693 = vsel %vm683, %v692, 0.0
    %v694 = vsel %vm265, %v693, 0.0
    %695 = vadd.xlane.f32.xlu0 %v694
    %v696 = vpop.xlane.xlu0 %695
    %v697 = vrcp.pop %v696
    %v698 = vmul.f32 %v693, %v697
    %v699 = vsel %vm684, %v678, 0.0
    %v700 = vsel %vm265, %v699, 0.0
    %701 = vadd.xlane.f32.xlu0 %v700
    %v702 = vpop.xlane.xlu0 %701
    %v703 = vtanh.pop %v702
    %v704 = vsel %vm684, %v703, %v698
    %705 = vst [vmem:[#allocation10] sm:$0x3] %v704
    // Predicated region
    $region54: #{tpu_custom_call.1} parent=1 // pred_check
      _
    $region55: #{tpu_custom_call.1} parent=1 // pred_check_branch
      %707 = sbr.rel (0) target = $region57
    $region56: #{tpu_custom_call.1} parent=1 // pred_region
      %s709 = ssub.s32 32, 32
      %710 = vsyncadd [#allocation4], %s709
      %s712 = sshll.u32 [#allocation10], 4
      %s713 = int_to_ptr.vmem [resolvable:$true] %s712
      %715 = dma.vmem_to_hbm [thread:$0]  %s713, 32, %s9, [#allocation4]
    $region57: #{tpu_custom_call.1} parent=1 // pred_fallthru
      _
    // Predicated region
    $region58: #{tpu_custom_call.1} parent=1 // pred_check
      _
    $region59: #{tpu_custom_call.1} parent=1 // pred_check_branch
      %717 = sbr.rel (0) target = $region61
    $region60: #{tpu_custom_call.1} parent=1 // pred_region
      %718 = dma.done [#allocation4], 32
    $region61: #{tpu_custom_call.1} parent=1 // pred_fallthru
      _
    %719 = vsyncpa [#allocation3], 1
    %720 = vsyncpa [#allocation6], 1
    %721 = vsyncpa [#allocation9], 1
    %722 = vsyncpa [#allocation4], 1

</llo_original>
